<compile_context>
chip_gen: v7x
topology: tpu7x:2x2x1
jax: 0.10.0
libtpu: 0.0.40
codegen_flags: <defaults>
</compile_context>

<pallas_src>
import functools

import jax
import jax.numpy as jnp
from jax.experimental import pallas as pl
from jax.experimental.pallas import tpu as pltpu

LANE = 128


def _round_up(n, m):
    return ((n + m - 1) // m) * m


def _xavier_uniform(key, d_out, d_in, dtype=jnp.float32):
    """torch.nn.init.xavier_uniform_ for a weight of shape [d_out, d_in]."""
    limit = (6.0 / (d_in + d_out)) ** 0.5
    return jax.random.uniform(key, (d_out, d_in), dtype=dtype,
                              minval=-limit, maxval=limit)


def _encoder_kernel(n_layers_total, out_pads, x_ref, *refs):
    """refs = (w0, w1, ..., wL, bias_packed, out_ref).

    Layers 0..L-1 apply ReLU; the final layer (index L) does not
    (matches Encoder: last LinearLayer has activation_function=None).
    Weights are bf16 (MXU native), accumulation / bias / ReLU are f32.
    """
    out_ref = refs[-1]
    b_ref = refs[-2]
    w_refs = refs[:-2]

    b_all = b_ref[...]                    # [L+1, max_pad] f32, loaded once
    z = x_ref[...]                        # [TM, d_in_pad] (compute dtype)
    for li in range(n_layers_total):
        w_ref = w_refs[li]
        zc = z.astype(w_ref.dtype)        # bf16 for the MXU
        acc = jnp.dot(zc, w_ref[...], preferred_element_type=jnp.float32)
        acc = acc + b_all[li:li + 1, 0:out_pads[li]]   # f32 bias, bcast over batch
        if li < n_layers_total - 1:       # ReLU on all but the last layer
            acc = jnp.maximum(acc, 0.0)
        z = acc
    out_ref[...] = z.astype(out_ref.dtype)


def encoder_forward(x, weights_padded, bias_packed, d_out, *, block_m=256):
    """x: [B, d_in] f32; weights_padded[i]: [d_in_pad_i, d_out_pad_i] bf16;
    bias_packed: [n_layers+1, max_pad] f32. Returns [B, d_out] f32."""
    B, d_in = x.shape
    n_layers_total = len(weights_padded)
    d_in_pad = weights_padded[0].shape[0]
    out_pads = tuple(int(w.shape[1]) for w in weights_padded)
    d_out_pad = out_pads[-1]
    compute_dtype = weights_padded[0].dtype

    # Batch tile: multiple of 8 sublanes, capped so the live activation stays
    # in registers across the unrolled layer chain.
    tm = min(block_m, _round_up(B, 8))
    B_pad = _round_up(B, tm)

    # Zero-pad batch rows and feature lanes; padded lanes stay exactly 0
    # through every layer (zero weight rows/cols + zero bias lanes + ReLU).
    xp = jnp.zeros((B_pad, d_in_pad), dtype=compute_dtype)
    xp = xp.at[:B, :d_in].set(x.astype(compute_dtype))

    operands = [xp]
    in_specs = [pl.BlockSpec((tm, d_in_pad), lambda i: (i, 0))]
    for w in weights_padded:
        operands.append(w)
        in_specs.append(pl.BlockSpec(w.shape, lambda i: (0, 0)))  # VMEM-resident
    operands.append(bias_packed)
    in_specs.append(pl.BlockSpec(bias_packed.shape, lambda i: (0, 0)))

    out_spec = pl.BlockSpec((tm, d_out_pad), lambda i: (i, 0))
    out_shape = jax.ShapeDtypeStruct((B_pad, d_out_pad), jnp.float32)

    kernel = functools.partial(_encoder_kernel, n_layers_total, out_pads)

    out_padded = pl.pallas_call(
        kernel,
        grid=(B_pad // tm,),
        in_specs=in_specs,
        out_specs=out_spec,
        out_shape=out_shape,
        compiler_params=pltpu.CompilerParams(
            dimension_semantics=("parallel",),        # megacore on v7x
            vmem_limit_bytes=32 * 1024 * 1024,        # safe on v5e/v6e/v7x
        ),
    )(*operands)

    return out_padded[:B, :d_out]


def make_encoder_params(key, d_in, hidden_dims, d_out, n_layers, bias=True,
                        param_dtype=jnp.bfloat16):
    """Build the n_layers+1 linear layers of Encoder, lane-padded to 128.

    Weights are stored pre-transposed [d_in_pad, d_out_pad] (so the kernel
    does h @ W, equivalent to torch's h @ W.T) and zero-padded; biases are
    packed into a single [n_layers+1, max_pad] f32 slab with padded lanes = 0.
    """
    dims = [(d_in, hidden_dims)]
    for _ in range(n_layers - 1):
        dims.append((hidden_dims, hidden_dims))
    dims.append((hidden_dims, d_out))

    max_pad = max(_round_up(do, LANE) for _, do in dims)

    weights_padded, bias_rows = [], []
    for di, do in dims:
        key, sub = jax.random.split(key)
        w_torch = _xavier_uniform(sub, do, di)              # torch layout [do, di]
        w = jnp.transpose(w_torch)                          # [di, do]
        di_pad, do_pad = _round_up(di, LANE), _round_up(do, LANE)
        wp = jnp.zeros((di_pad, do_pad), jnp.float32).at[:di, :do].set(w)
        weights_padded.append(wp.astype(param_dtype))

        b_val = 0.01 if bias else 0.0                       # torch: bias.data.fill_(0.01)
        bias_rows.append(jnp.zeros((max_pad,), jnp.float32).at[:do].set(b_val))

    bias_packed = jnp.stack(bias_rows, axis=0)              # [n_layers+1, max_pad]
    return weights_padded, bias_packed, dims


def encoder_reference(x, weights_padded, bias_packed, d_out):
    """Pure-JAX reference of the same (bf16-matmul, f32-accumulate) forward."""
    compute_dtype = weights_padded[0].dtype
    B, d_in = x.shape
    d_in_pad = weights_padded[0].shape[0]
    z = jnp.zeros((B, d_in_pad), jnp.float32).at[:, :d_in].set(x)
    n = len(weights_padded)
    for li, w in enumerate(weights_padded):
        do_pad = w.shape[1]
        acc = jnp.dot(z.astype(compute_dtype), w,
                      preferred_element_type=jnp.float32)
        acc = acc + bias_packed[li:li + 1, :do_pad]
        if li < n - 1:
            acc = jnp.maximum(acc, 0.0)
        z = acc
    return z[:, :d_out]


if __name__ == "__main__":
    # Encoder(d_in, hidden_dims, d_out, n_layers, bias, ReLU, noise_std).
    # Batch is sized so the batch grid axis actually has >1 step (TM=256).
    B, d_in, hidden, d_out, n_layers = 512, 32, 32, 16, 2

    key = jax.random.PRNGKey(0)
    key, xkey = jax.random.split(key)
    x = jax.random.normal(xkey, (B, d_in), dtype=jnp.float32)

    weights_padded, bias_packed, _ = make_encoder_params(
        key, d_in, hidden, d_out, n_layers, bias=True)

    z = encoder_forward(x, weights_padded, bias_packed, d_out, block_m=256)
    z = jax.block_until_ready(z)

    z_ref = encoder_reference(x, weights_padded, bias_packed, d_out)
    assert z.shape == (B, d_out)
    assert jnp.allclose(z, z_ref, atol=2e-3, rtol=2e-3), "mismatch vs reference"

    # TODO(synk): noisy forward path (np.random.normal noise injection) and
    # hidden-state caching (clean_buffer/noisy_buffer) are stateful/host-side
    # behaviors, not part of the compute hot path; only the clean forward is
    # implemented in the kernel.
    print("KERNEL_OK")
</pallas_src>

<mosaic_0001>
module attributes {stable_mosaic.version = 11 : i64} {
  func.func @_encoder_kernel(%arg0: i32, %arg1: memref<256x128xbf16, #tpu.memory_space<vmem>>, %arg2: memref<128x128xbf16, #tpu.memory_space<vmem>>, %arg3: memref<128x128xbf16, #tpu.memory_space<vmem>>, %arg4: memref<128x128xbf16, #tpu.memory_space<vmem>>, %arg5: memref<3x128xf32, #tpu.memory_space<vmem>>, %arg6: memref<256x128xf32, #tpu.memory_space<vmem>>) attributes {dimension_semantics = [#tpu.dimension_semantics<parallel>], iteration_bounds = array<i64: 2>, scalar_prefetch = 0 : i64, scratch_operands = 0 : i64, tpu.core_type = #tpu.core_type<tc>, window_params = [{transform_indices = @transform_0, window_bounds = array<i64: 256, 128>}, {pipeline_mode = #tpu.pipeline_mode<synchronous>, transform_indices = @transform_1, window_bounds = array<i64: 128, 128>}, {pipeline_mode = #tpu.pipeline_mode<synchronous>, transform_indices = @transform_2, window_bounds = array<i64: 128, 128>}, {pipeline_mode = #tpu.pipeline_mode<synchronous>, transform_indices = @transform_3, window_bounds = array<i64: 128, 128>}, {pipeline_mode = #tpu.pipeline_mode<synchronous>, transform_indices = @transform_4, window_bounds = array<i64: 3, 128>}, {transform_indices = @transform_5, window_bounds = array<i64: 256, 128>}]} {
    %c0 = arith.constant 0 : index
    %c0_0 = arith.constant 0 : index
    %0 = vector.load %arg5[%c0, %c0_0] : memref<3x128xf32, #tpu.memory_space<vmem>>, vector<3x128xf32>
    %c0_1 = arith.constant 0 : index
    %c0_2 = arith.constant 0 : index
    %1 = vector.load %arg1[%c0_1, %c0_2] : memref<256x128xbf16, #tpu.memory_space<vmem>>, vector<256x128xbf16>
    %c0_3 = arith.constant 0 : index
    %c0_4 = arith.constant 0 : index
    %2 = vector.load %arg2[%c0_3, %c0_4] : memref<128x128xbf16, #tpu.memory_space<vmem>>, vector<128x128xbf16>
    %cst = arith.constant dense<0.000000e+00> : vector<256x128xf32>
    %3 = tpu.matmul %1, %2, %cst {dimension_numbers = #tpu.dot_dimension_numbers<[1], [0], [0], [1], [0, 0, 1, 1], [], []>} : vector<256x128xbf16>, vector<128x128xbf16>, vector<256x128xf32> -> vector<256x128xf32>
    %4 = vector.extract_strided_slice %0 {offsets = [0, 0], sizes = [1, 128], strides = [1, 1]} : vector<3x128xf32> to vector<1x128xf32>
    %5 = vector.broadcast %4 : vector<1x128xf32> to vector<256x128xf32>
    %6 = arith.addf %3, %5 : vector<256x128xf32>
    %cst_5 = arith.constant 0.000000e+00 : f32
    %7 = vector.broadcast %cst_5 : f32 to vector<256x128xf32>
    %8 = arith.maximumf %6, %7 : vector<256x128xf32>
    %9 = arith.truncf %8 : vector<256x128xf32> to vector<256x128xbf16>
    %c0_6 = arith.constant 0 : index
    %c0_7 = arith.constant 0 : index
    %10 = vector.load %arg3[%c0_6, %c0_7] : memref<128x128xbf16, #tpu.memory_space<vmem>>, vector<128x128xbf16>
    %cst_8 = arith.constant dense<0.000000e+00> : vector<256x128xf32>
    %11 = tpu.matmul %9, %10, %cst_8 {dimension_numbers = #tpu.dot_dimension_numbers<[1], [0], [0], [1], [0, 0, 1, 1], [], []>} : vector<256x128xbf16>, vector<128x128xbf16>, vector<256x128xf32> -> vector<256x128xf32>
    %12 = vector.extract_strided_slice %0 {offsets = [1, 0], sizes = [1, 128], strides = [1, 1]} : vector<3x128xf32> to vector<1x128xf32>
    %13 = vector.broadcast %12 : vector<1x128xf32> to vector<256x128xf32>
    %14 = arith.addf %11, %13 : vector<256x128xf32>
    %cst_9 = arith.constant 0.000000e+00 : f32
    %15 = vector.broadcast %cst_9 : f32 to vector<256x128xf32>
    %16 = arith.maximumf %14, %15 : vector<256x128xf32>
    %17 = arith.truncf %16 : vector<256x128xf32> to vector<256x128xbf16>
    %c0_10 = arith.constant 0 : index
    %c0_11 = arith.constant 0 : index
    %18 = vector.load %arg4[%c0_10, %c0_11] : memref<128x128xbf16, #tpu.memory_space<vmem>>, vector<128x128xbf16>
    %cst_12 = arith.constant dense<0.000000e+00> : vector<256x128xf32>
    %19 = tpu.matmul %17, %18, %cst_12 {dimension_numbers = #tpu.dot_dimension_numbers<[1], [0], [0], [1], [0, 0, 1, 1], [], []>} : vector<256x128xbf16>, vector<128x128xbf16>, vector<256x128xf32> -> vector<256x128xf32>
    %20 = vector.extract_strided_slice %0 {offsets = [2, 0], sizes = [1, 128], strides = [1, 1]} : vector<3x128xf32> to vector<1x128xf32>
    %21 = vector.broadcast %20 : vector<1x128xf32> to vector<256x128xf32>
    %22 = arith.addf %19, %21 : vector<256x128xf32>
    %c0_13 = arith.constant 0 : index
    %c0_14 = arith.constant 0 : index
    %23 = vector.load %arg6[%c0_13, %c0_14] : memref<256x128xf32, #tpu.memory_space<vmem>>, vector<256x128xf32>
    tpu.vector_store %arg6[%c0_13, %c0_14], %22 {strides = array<i32>} : memref<256x128xf32, #tpu.memory_space<vmem>>, vector<256x128xf32>,
    return
  }
  func.func @transform_0(%arg0: i32) -> (i32, i32) {
    %c0_i32 = arith.constant 0 : i32
    %c0_i32_0 = arith.constant 0 : i32
    return %arg0, %c0_i32 : i32, i32
  }
  func.func @transform_1(%arg0: i32) -> (i32, i32) {
    %c0_i32 = arith.constant 0 : i32
    %c0_i32_0 = arith.constant 0 : i32
    %c0_i32_1 = arith.constant 0 : i32
    return %c0_i32, %c0_i32_0 : i32, i32
  }
  func.func @transform_2(%arg0: i32) -> (i32, i32) {
    %c0_i32 = arith.constant 0 : i32
    %c0_i32_0 = arith.constant 0 : i32
    %c0_i32_1 = arith.constant 0 : i32
    return %c0_i32, %c0_i32_0 : i32, i32
  }
  func.func @transform_3(%arg0: i32) -> (i32, i32) {
    %c0_i32 = arith.constant 0 : i32
    %c0_i32_0 = arith.constant 0 : i32
    %c0_i32_1 = arith.constant 0 : i32
    return %c0_i32, %c0_i32_0 : i32, i32
  }
  func.func @transform_4(%arg0: i32) -> (i32, i32) {
    %c0_i32 = arith.constant 0 : i32
    %c0_i32_0 = arith.constant 0 : i32
    %c0_i32_1 = arith.constant 0 : i32
    return %c0_i32, %c0_i32_0 : i32, i32
  }
  func.func @transform_5(%arg0: i32) -> (i32, i32) {
    %c0_i32 = arith.constant 0 : i32
    %c0_i32_0 = arith.constant 0 : i32
    return %arg0, %c0_i32 : i32, i32
  }
}

</mosaic_0001>

<llo_original>
// kernel: tpu_custom_call.1
$region0: #{tpu_custom_call.1}
  #allocation0 [shape = 'u32[]', space=smem, size = 0x4, offset = 0x4, fixed_abs, tag = 'smem constant byte address 0x4 - core index']
  #allocation1 [shape = 'u32[144,128]{1,0:T(1,128)}', space=vmem, size = 0x12000, scoped, tag = 'internal scratch']
  %s0 = inlined_call_operand.hbm [shape: bf16[512,128], index: 0, kind: input, shape index: {}]
  %s1 = inlined_call_operand.hbm [shape: bf16[128,128], index: 1, kind: input, shape index: {}]
  %s2 = inlined_call_operand.hbm [shape: bf16[128,128], index: 2, kind: input, shape index: {}]
  %s3 = inlined_call_operand.hbm [shape: bf16[128,128], index: 3, kind: input, shape index: {}]
  %s4 = inlined_call_operand.vmem [shape: f32[3,128], index: 4, kind: input, shape index: {}]
  %s5 = inlined_call_operand.hbm [shape: f32[512,128], index: 5, kind: output, shape index: {}]
  %s6 = sld [smem:[#allocation0]]
  $region69: #{tpu_custom_call.1} parent=0
    _
  %s8 = ssub.s32 1, %s6
  %s9 = scalar_select 0, %s8, %s6
  $region1: #{tpu_custom_call.1} parent=0
    #allocation2 [shape = 'u8[131072]{0}', space=vmem, size = 0x20000, scoped, tag = 'input window, operand 0']
    #allocation3 [shape = 's32[2]{0}', space=sflag, size = 0x8, scoped, tag = 'scoped memory for tpu_custom_call.1']
    #allocation4 [shape = 's32[2]{0}', space=sflag, size = 0x8, scoped, tag = 'scoped memory for tpu_custom_call.1']
    #allocation5 [shape = 'u8[32768]{0}', space=vmem, size = 0x8000, scoped, tag = 'input window, operand 1, single buffered']
    #allocation6 [shape = 's32[1]{0}', space=sflag, size = 0x4, scoped, tag = 'scoped memory for tpu_custom_call.1']
    #allocation7 [shape = 'u8[32768]{0}', space=vmem, size = 0x8000, scoped, tag = 'input window, operand 2, single buffered']
    #allocation8 [shape = 'u8[32768]{0}', space=vmem, size = 0x8000, scoped, tag = 'input window, operand 3, single buffered']
    #allocation9 [shape = 's32[1]{0}', space=sflag, size = 0x4, scoped, tag = 'scoped memory for tpu_custom_call.1']
    #allocation10 [shape = 'u8[262144]{0}', space=vmem, size = 0x40000, scoped, tag = 'output window, operand 0']
    %10 = vsyncpa [#allocation3], 0
    %s11 = scalar_lea.sflag [#allocation3], 1
    %12 = vsyncpa %s11, 0
    %13 = vsyncpa [#allocation6], 0
    %14 = vsyncpa [#allocation9], 0
    %15 = vsyncpa [#allocation4], 0
    %s16 = scalar_lea.sflag [#allocation4], 1
    %17 = vsyncpa %s16, 0
    loop: start=0, step=1, limit=4
    $region2: #{tpu_custom_call.1} parent=1 // loop_pre_header
      _
    $region3: #{tpu_custom_call.1} parent=1 // loop_header
      %s19 = sphi 0, %s23
      %p20 = scmp.ge.s32.totalorder %s19, 4
      %s29 = sphi 0, %s31
      %s32 = sphi 0, %s29
      %s33 = sphi 0, %s32
      %s49 = sphi 0, %s33
      %s53 = sphi 0, %s53
      %s55 = sphi 0, %s53
      %s56 = sphi 0, %s55
      %s70 = sphi 0, %s56
      %s74 = sphi 0, %s74
      %s76 = sphi 0, %s74
      %s77 = sphi 0, %s76
      %s91 = sphi 0, %s77
      %s95 = sphi 0, %s95
      %s97 = sphi 0, %s95
      %s98 = sphi 0, %s97
      %s112 = sphi 0, %s98
      %s116 = sphi 0, %s116
      %s118 = sphi 0, %s116
      %s119 = sphi 0, %s118
      %s133 = sphi 0, %s119
      %s139 = sphi 0, %s141
      %s142 = sphi 0, %s139
      %s143 = sphi 0, %s142
      %s159 = sphi 0, %s143
    $region4: #{tpu_custom_call.1} parent=1 // loop_header_branch
      %22 = sbr.rel (%p20) target = $region8
    $region5: #{tpu_custom_call.1} parent=1 // loop_body
      %s24 = ssub.s32 %s19, 1
      %s25 = ssub.s32 %s19, 2
      %s26 = sadd.s32 %s19, 1
      %s27 = ssub.s32 %s19, %s26
      %p28 = scmp.eq.s32.totalorder %s27, 0
      %s30 = sadd.s32 %s29, 1
      %s31 = scalar_select %p28, %s29, %s30
      %p34 = pneg %p28
      %p35 = scmp.eq.s32.totalorder %s19, 1
      %p36 = por %p34, %p35
      %p37 = scmp.ne.s32.totalorder %s29, %s32
      %p38 = scmp.eq.s32.totalorder %s19, 0
      %p39 = por %p37, %p38
      %p40 = scmp.ne.s32.totalorder %s29, %s32
      %p41 = scmp.eq.s32.totalorder %s24, 1
      %p42 = por %p40, %p41
      %p43 = scmp.ne.s32.totalorder %s32, %s33
      %p44 = scmp.eq.s32.totalorder %s24, 0
      %p45 = por %p43, %p44
      %p46 = scmp.ne.s32.totalorder %s32, %s33
      %p47 = scmp.eq.s32.totalorder %s25, 1
      %p48 = por %p46, %p47
      %p50 = scmp.ne.s32.totalorder %s33, %s49
      %p51 = scmp.eq.s32.totalorder %s25, 0
      %p52 = por %p50, %p51
      %s54 = sadd.s32 %s53, 1
      %p57 = scmp.eq.s32.totalorder %s19, 1
      %p58 = scmp.ne.s32.totalorder %s53, %s55
      %p59 = scmp.eq.s32.totalorder %s19, 0
      %p60 = por %p58, %p59
      %p61 = scmp.ne.s32.totalorder %s53, %s55
      %p62 = scmp.eq.s32.totalorder %s24, 1
      %p63 = por %p61, %p62
      %p64 = scmp.ne.s32.totalorder %s55, %s56
      %p65 = scmp.eq.s32.totalorder %s24, 0
      %p66 = por %p64, %p65
      %p67 = scmp.ne.s32.totalorder %s55, %s56
      %p68 = scmp.eq.s32.totalorder %s25, 1
      %p69 = por %p67, %p68
      %p71 = scmp.ne.s32.totalorder %s56, %s70
      %p72 = scmp.eq.s32.totalorder %s25, 0
      %p73 = por %p71, %p72
      %s75 = sadd.s32 %s74, 1
      %p78 = scmp.eq.s32.totalorder %s19, 1
      %p79 = scmp.ne.s32.totalorder %s74, %s76
      %p80 = scmp.eq.s32.totalorder %s19, 0
      %p81 = por %p79, %p80
      %p82 = scmp.ne.s32.totalorder %s74, %s76
      %p83 = scmp.eq.s32.totalorder %s24, 1
      %p84 = por %p82, %p83
      %p85 = scmp.ne.s32.totalorder %s76, %s77
      %p86 = scmp.eq.s32.totalorder %s24, 0
      %p87 = por %p85, %p86
      %p88 = scmp.ne.s32.totalorder %s76, %s77
      %p89 = scmp.eq.s32.totalorder %s25, 1
      %p90 = por %p88, %p89
      %p92 = scmp.ne.s32.totalorder %s77, %s91
      %p93 = scmp.eq.s32.totalorder %s25, 0
      %p94 = por %p92, %p93
      %s96 = sadd.s32 %s95, 1
      %p99 = scmp.eq.s32.totalorder %s19, 1
      %p100 = scmp.ne.s32.totalorder %s95, %s97
      %p101 = scmp.eq.s32.totalorder %s19, 0
      %p102 = por %p100, %p101
      %p103 = scmp.ne.s32.totalorder %s95, %s97
      %p104 = scmp.eq.s32.totalorder %s24, 1
      %p105 = por %p103, %p104
      %p106 = scmp.ne.s32.totalorder %s97, %s98
      %p107 = scmp.eq.s32.totalorder %s24, 0
      %p108 = por %p106, %p107
      %p109 = scmp.ne.s32.totalorder %s97, %s98
      %p110 = scmp.eq.s32.totalorder %s25, 1
      %p111 = por %p109, %p110
      %p113 = scmp.ne.s32.totalorder %s98, %s112
      %p114 = scmp.eq.s32.totalorder %s25, 0
      %p115 = por %p113, %p114
      %s117 = sadd.s32 %s116, 1
      %p120 = scmp.eq.s32.totalorder %s19, 1
      %p121 = scmp.ne.s32.totalorder %s116, %s118
      %p122 = scmp.eq.s32.totalorder %s19, 0
      %p123 = por %p121, %p122
      %p124 = scmp.ne.s32.totalorder %s116, %s118
      %p125 = scmp.eq.s32.totalorder %s24, 1
      %p126 = por %p124, %p125
      %p127 = scmp.ne.s32.totalorder %s118, %s119
      %p128 = scmp.eq.s32.totalorder %s24, 0
      %p129 = por %p127, %p128
      %p130 = scmp.ne.s32.totalorder %s118, %s119
      %p131 = scmp.eq.s32.totalorder %s25, 1
      %p132 = por %p130, %p131
      %p134 = scmp.ne.s32.totalorder %s119, %s133
      %p135 = scmp.eq.s32.totalorder %s25, 0
      %p136 = por %p134, %p135
      %s137 = ssub.s32 %s19, %s26
      %p138 = scmp.eq.s32.totalorder %s137, 0
      %s140 = sadd.s32 %s139, 1
      %s141 = scalar_select %p138, %s139, %s140
      %p144 = pneg %p138
      %p145 = scmp.eq.s32.totalorder %s19, 1
      %p146 = por %p144, %p145
      %p147 = scmp.ne.s32.totalorder %s139, %s142
      %p148 = scmp.eq.s32.totalorder %s19, 0
      %p149 = por %p147, %p148
      %p150 = scmp.ne.s32.totalorder %s139, %s142
      %p151 = scmp.eq.s32.totalorder %s24, 1
      %p152 = por %p150, %p151
      %p153 = scmp.ne.s32.totalorder %s142, %s143
      %p154 = scmp.eq.s32.totalorder %s24, 0
      %p155 = por %p153, %p154
      %p156 = scmp.ne.s32.totalorder %s142, %s143
      %p157 = scmp.eq.s32.totalorder %s25, 1
      %p158 = por %p156, %p157
      %p160 = scmp.ne.s32.totalorder %s143, %s159
      %p161 = scmp.eq.s32.totalorder %s25, 0
      %p162 = por %p160, %p161
      %p163 = scmp.le.s32.totalorder 1, %s19
      %p164 = scmp.lt.s32.totalorder %s19, 3
      %p165 = pnand %p163, %p164
      %p166 = pneg %p165
      // Predicated region
      $region9: #{tpu_custom_call.1} parent=5 // pred_check
        _
      $region10: #{tpu_custom_call.1} parent=5 // pred_check_branch
        %168 = sbr.rel (%p165) target = $region12
      $region11: #{tpu_custom_call.1} parent=5 // pred_region
        %s169 = ssub.s32 %s19, 1
        // Predicated region
        $region13: #{tpu_custom_call.1} parent=11 // pred_check
          %p170 = pneg %p66
        $region14: #{tpu_custom_call.1} parent=11 // pred_check_branch
          %172 = sbr.rel (%p170) target = $region16
        $region15: #{tpu_custom_call.1} parent=11 // pred_region
          %s174 = ssub.s32 1024, 1024
          %175 = vsyncadd [#allocation6], %s174
          %s176 = sshll.u32 [#allocation5], 4
          %s177 = int_to_ptr.vmem [resolvable:$true] %s176
          %182 = dma.hbm_to_vmem [thread:$0]  %s1, 1024, %s177, [#allocation6], 64, 64, 4
        $region16: #{tpu_custom_call.1} parent=11 // pred_fallthru
          _
        // Predicated region
        $region17: #{tpu_custom_call.1} parent=11 // pred_check
          %p183 = pneg %p87
        $region18: #{tpu_custom_call.1} parent=11 // pred_check_branch
          %185 = sbr.rel (%p183) target = $region20
        $region19: #{tpu_custom_call.1} parent=11 // pred_region
          %s187 = ssub.s32 1024, 1024
          %188 = vsyncadd [#allocation6], %s187
          %s189 = sshll.u32 [#allocation7], 4
          %s190 = int_to_ptr.vmem [resolvable:$true] %s189
          %195 = dma.hbm_to_vmem [thread:$0]  %s2, 1024, %s190, [#allocation6], 64, 64, 4
        $region20: #{tpu_custom_call.1} parent=11 // pred_fallthru
          _
        // Predicated region
        $region21: #{tpu_custom_call.1} parent=11 // pred_check
          %p196 = pneg %p108
        $region22: #{tpu_custom_call.1} parent=11 // pred_check_branch
          %198 = sbr.rel (%p196) target = $region24
        $region23: #{tpu_custom_call.1} parent=11 // pred_region
          %s200 = ssub.s32 1024, 1024
          %201 = vsyncadd [#allocation9], %s200
          %s202 = sshll.u32 [#allocation8], 4
          %s203 = int_to_ptr.vmem [resolvable:$true] %s202
          %208 = dma.hbm_to_vmem [thread:$0]  %s3, 1024, %s203, [#allocation9], 64, 64, 4
        $region24: #{tpu_custom_call.1} parent=11 // pred_fallthru
          _
        // Predicated region
        $region25: #{tpu_custom_call.1} parent=11 // pred_check
          %p209 = pneg %p129
        $region26: #{tpu_custom_call.1} parent=11 // pred_check_branch
          %211 = sbr.rel (%p209) target = $region28
        $region27: #{tpu_custom_call.1} parent=11 // pred_region
          _
        $region28: #{tpu_custom_call.1} parent=11 // pred_fallthru
          _
      $region12: #{tpu_custom_call.1} parent=5 // pred_fallthru
        _
      %p212 = scmp.lt.s32.totalorder %s19, 2
      // Predicated region
      $region29: #{tpu_custom_call.1} parent=5 // pred_check
        %p213 = pneg %p212
      $region30: #{tpu_custom_call.1} parent=5 // pred_check_branch
        %215 = sbr.rel (%p213) target = $region32
      $region31: #{tpu_custom_call.1} parent=5 // pred_region
        // Predicated region
        $region33: #{tpu_custom_call.1} parent=31 // pred_check
          %p216 = pneg %p39
        $region34: #{tpu_custom_call.1} parent=31 // pred_check_branch
          %218 = sbr.rel (%p216) target = $region36
        $region35: #{tpu_custom_call.1} parent=31 // pred_region
          %s219 = sand.u32 %s29, 1
          %s220 = scalar_lea.sflag [#allocation3], %s219
          %s221 = sand.u32 %s29, 1
          %s222 = smul.addr %s221, 128
          %s223 = scalar_lea.vmem [#allocation2], %s222
          %s224 = smul.u32 32, %s19
          %s226 = ssub.s32 2048, 2048
          %227 = vsyncadd %s220, %s226
          %s228 = smul.addr %s224, 64
          %s229 = scalar_lea.hbm %s0, %s228
          %s230 = sshll.u32 %s223, 4
          %s231 = int_to_ptr.vmem [resolvable:$true] %s230
          %236 = dma.hbm_to_vmem [thread:$0]  %s229, 2048, %s231, %s220, 64, 64, 4
        $region36: #{tpu_custom_call.1} parent=31 // pred_fallthru
          _
      $region32: #{tpu_custom_call.1} parent=5 // pred_fallthru
        _
      %p237 = scmp.le.s32.totalorder 1, %s19
      %p238 = scmp.lt.s32.totalorder %s19, 3
      %p239 = pnand %p237, %p238
      %p240 = pneg %p239
      // Predicated region
      $region37: #{tpu_custom_call.1} parent=5 // pred_check
        _
      $region38: #{tpu_custom_call.1} parent=5 // pred_check_branch
        %242 = sbr.rel (%p239) target = $region40
      $region39: #{tpu_custom_call.1} parent=5 // pred_region
        %s243 = ssub.s32 %s19, 1
        %s244 = sand.u32 %s32, 1
        %s245 = scalar_lea.sflag [#allocation3], %s244
        %s246 = sand.u32 %s32, 1
        %s247 = smul.addr %s246, 128
        %s248 = scalar_lea.vmem [#allocation2], %s247
        // Predicated region
        $region41: #{tpu_custom_call.1} parent=39 // pred_check
          %p249 = pneg %p45
        $region42: #{tpu_custom_call.1} parent=39 // pred_check_branch
          %251 = sbr.rel (%p249) target = $region44
        $region43: #{tpu_custom_call.1} parent=39 // pred_region
          %252 = dma.done %s245, 2048
        $region44: #{tpu_custom_call.1} parent=39 // pred_fallthru
          _
        // Predicated region
        $region45: #{tpu_custom_call.1} parent=39 // pred_check
          %p253 = pneg %p66
        $region46: #{tpu_custom_call.1} parent=39 // pred_check_branch
          %255 = sbr.rel (%p253) target = $region48
        $region47: #{tpu_custom_call.1} parent=39 // pred_region
          %256 = dma.done [#allocation6], 1024
        $region48: #{tpu_custom_call.1} parent=39 // pred_fallthru
          _
        // Predicated region
        $region49: #{tpu_custom_call.1} parent=39 // pred_check
          %p257 = pneg %p87
        $region50: #{tpu_custom_call.1} parent=39 // pred_check_branch
          %259 = sbr.rel (%p257) target = $region52
        $region51: #{tpu_custom_call.1} parent=39 // pred_region
          %260 = dma.done [#allocation6], 1024
        $region52: #{tpu_custom_call.1} parent=39 // pred_fallthru
          _
        // Predicated region
        $region53: #{tpu_custom_call.1} parent=39 // pred_check
          %p261 = pneg %p108
        $region54: #{tpu_custom_call.1} parent=39 // pred_check_branch
          %263 = sbr.rel (%p261) target = $region56
        $region55: #{tpu_custom_call.1} parent=39 // pred_region
          %264 = dma.done [#allocation9], 1024
        $region56: #{tpu_custom_call.1} parent=39 // pred_fallthru
          _
        %s265 = sand.u32 %s32, 1
        %s266 = scalar_lea.sflag [#allocation3], %s265
        %s267 = sand.u32 %s32, 1
        %s268 = smul.addr %s267, 128
        %s269 = scalar_lea.vmem [#allocation2], %s268
        %p270 = pneg %p45
        %p271 = pneg %p42
        %p272 = pneg %p66
        %p273 = pneg %p63
        %p274 = pneg %p87
        %p275 = pneg %p84
        %p276 = pneg %p108
        %p277 = pneg %p105
        %p278 = pneg %p129
        %p279 = pneg %p126
        %p280 = pneg %p155
        %p281 = pneg %p152
        %s282 = sand.u32 %s142, 1
        %s283 = scalar_lea.sflag [#allocation4], %s282
        %s284 = sand.u32 %s142, 1
        %s285 = smul.addr %s284, 256
        %s286 = scalar_lea.vmem [#allocation10], %s285
        %s287 = smul.u32 32, %s24
        %s288 = smul.u32 32, %s24
        %v290 = vld [vmem:[%s4] sm:$0x7]
        %v291 = vld [vmem:[%s248] sm:$0xf]
        %v292 = vld [vmem:[%s248 + $0x4] sm:$0xf]
        %v293 = vld [vmem:[%s248 + $0x8] sm:$0xf]
        %v294 = vld [vmem:[%s248 + $0xc] sm:$0xf]
        %v295 = vld [vmem:[%s248 + $0x10] sm:$0xf]
        %v296 = vld [vmem:[%s248 + $0x14] sm:$0xf]
        %v297 = vld [vmem:[%s248 + $0x18] sm:$0xf]
        %v298 = vld [vmem:[%s248 + $0x1c] sm:$0xf]
        %v299 = vld [vmem:[%s248 + $0x20] sm:$0xf]
        %v300 = vld [vmem:[%s248 + $0x24] sm:$0xf]
        %v301 = vld [vmem:[%s248 + $0x28] sm:$0xf]
        %v302 = vld [vmem:[%s248 + $0x2c] sm:$0xf]
        %v303 = vld [vmem:[%s248 + $0x30] sm:$0xf]
        %v304 = vld [vmem:[%s248 + $0x34] sm:$0xf]
        %v305 = vld [vmem:[%s248 + $0x38] sm:$0xf]
        %v306 = vld [vmem:[%s248 + $0x3c] sm:$0xf]
        %v307 = vld [vmem:[%s248 + $0x40] sm:$0xf]
        %v308 = vld [vmem:[%s248 + $0x44] sm:$0xf]
        %v309 = vld [vmem:[%s248 + $0x48] sm:$0xf]
        %v310 = vld [vmem:[%s248 + $0x4c] sm:$0xf]
        %v311 = vld [vmem:[%s248 + $0x50] sm:$0xf]
        %v312 = vld [vmem:[%s248 + $0x54] sm:$0xf]
        %v313 = vld [vmem:[%s248 + $0x58] sm:$0xf]
        %v314 = vld [vmem:[%s248 + $0x5c] sm:$0xf]
        %v315 = vld [vmem:[%s248 + $0x60] sm:$0xf]
        %v316 = vld [vmem:[%s248 + $0x64] sm:$0xf]
        %v317 = vld [vmem:[%s248 + $0x68] sm:$0xf]
        %v318 = vld [vmem:[%s248 + $0x6c] sm:$0xf]
        %v319 = vld [vmem:[%s248 + $0x70] sm:$0xf]
        %v320 = vld [vmem:[%s248 + $0x74] sm:$0xf]
        %v321 = vld [vmem:[%s248 + $0x78] sm:$0xf]
        %v322 = vld [vmem:[%s248 + $0x7c] sm:$0xf]
        %v323 = vld [vmem:[#allocation5] sm:$0xf]
        %v324 = vld [vmem:[#allocation5 + $0x4] sm:$0xf]
        %v325 = vld [vmem:[#allocation5 + $0x8] sm:$0xf]
        %v326 = vld [vmem:[#allocation5 + $0xc] sm:$0xf]
        %v327 = vld [vmem:[#allocation5 + $0x10] sm:$0xf]
        %v328 = vld [vmem:[#allocation5 + $0x14] sm:$0xf]
        %v329 = vld [vmem:[#allocation5 + $0x18] sm:$0xf]
        %v330 = vld [vmem:[#allocation5 + $0x1c] sm:$0xf]
        %v331 = vld [vmem:[#allocation5 + $0x20] sm:$0xf]
        %v332 = vld [vmem:[#allocation5 + $0x24] sm:$0xf]
        %v333 = vld [vmem:[#allocation5 + $0x28] sm:$0xf]
        %v334 = vld [vmem:[#allocation5 + $0x2c] sm:$0xf]
        %v335 = vld [vmem:[#allocation5 + $0x30] sm:$0xf]
        %v336 = vld [vmem:[#allocation5 + $0x34] sm:$0xf]
        %v337 = vld [vmem:[#allocation5 + $0x38] sm:$0xf]
        %v338 = vld [vmem:[#allocation5 + $0x3c] sm:$0xf]
        %v339 = vlaneseq
        %v340 = vshrl.u32 %v339, 7
        %v341 = vsub.s32 0, %v340
        %v342 = vrot.slane %v290, %v341
        %v375 = vunpack.c.l.b16 %v291
        %v376 = vunpack.c.l.b16 %v292
        %v377 = vunpack.c.l.b16 %v293
        %v378 = vunpack.c.l.b16 %v294
        %v379 = vunpack.c.l.b16 %v295
        %v380 = vunpack.c.l.b16 %v296
        %v381 = vunpack.c.l.b16 %v297
        %v382 = vunpack.c.l.b16 %v298
        %v383 = vunpack.c.l.b16 %v299
        %v384 = vunpack.c.l.b16 %v300
        %v385 = vunpack.c.l.b16 %v301
        %v386 = vunpack.c.l.b16 %v302
        %v387 = vunpack.c.l.b16 %v303
        %v388 = vunpack.c.l.b16 %v304
        %v389 = vunpack.c.l.b16 %v305
        %v390 = vunpack.c.l.b16 %v306
        %v391 = vunpack.c.l.b16 %v307
        %v392 = vunpack.c.l.b16 %v308
        %v393 = vunpack.c.l.b16 %v309
        %v394 = vunpack.c.l.b16 %v310
        %v395 = vunpack.c.l.b16 %v311
        %v396 = vunpack.c.l.b16 %v312
        %v397 = vunpack.c.l.b16 %v313
        %v398 = vunpack.c.l.b16 %v314
        %v399 = vunpack.c.l.b16 %v315
        %v400 = vunpack.c.l.b16 %v316
        %v401 = vunpack.c.l.b16 %v317
        %v402 = vunpack.c.l.b16 %v318
        %v403 = vunpack.c.l.b16 %v319
        %v404 = vunpack.c.l.b16 %v320
        %v405 = vunpack.c.l.b16 %v321
        %v406 = vunpack.c.l.b16 %v322
        %v407 = vpack.c.b16 %v376, %v375
        %v408 = vpack.c.b16 %v378, %v377
        %v409 = vpack.c.b16 %v380, %v379
        %v410 = vpack.c.b16 %v382, %v381
        %v411 = vpack.c.b16 %v384, %v383
        %v412 = vpack.c.b16 %v386, %v385
        %v413 = vpack.c.b16 %v388, %v387
        %v414 = vpack.c.b16 %v390, %v389
        %v415 = vpack.c.b16 %v392, %v391
        %v416 = vpack.c.b16 %v394, %v393
        %v417 = vpack.c.b16 %v396, %v395
        %v418 = vpack.c.b16 %v398, %v397
        %v419 = vpack.c.b16 %v400, %v399
        %v420 = vpack.c.b16 %v402, %v401
        %v421 = vpack.c.b16 %v404, %v403
        %v422 = vpack.c.b16 %v406, %v405
        %v455 = vunpack.c.l.b16 %v323
        %v456 = vunpack.c.l.b16 %v324
        %v457 = vunpack.c.l.b16 %v325
        %v458 = vunpack.c.l.b16 %v326
        %v459 = vunpack.c.l.b16 %v327
        %v460 = vunpack.c.l.b16 %v328
        %v461 = vunpack.c.l.b16 %v329
        %v462 = vunpack.c.l.b16 %v330
        %v463 = vunpack.c.l.b16 %v331
        %v464 = vunpack.c.l.b16 %v332
        %v465 = vunpack.c.l.b16 %v333
        %v466 = vunpack.c.l.b16 %v334
        %v467 = vunpack.c.l.b16 %v335
        %v468 = vunpack.c.l.b16 %v336
        %v469 = vunpack.c.l.b16 %v337
        %v470 = vunpack.c.l.b16 %v338
        %v471 = vpack.c.b16 %v456, %v455
        %v472 = vpack.c.b16 %v458, %v457
        %v473 = vpack.c.b16 %v460, %v459
        %v474 = vpack.c.b16 %v462, %v461
        %v475 = vpack.c.b16 %v464, %v463
        %v476 = vpack.c.b16 %v466, %v465
        %v477 = vpack.c.b16 %v468, %v467
        %v478 = vpack.c.b16 %v470, %v469
        %487 = vmatprep.subr.bf16.mxu0 0
        %488 = vmatpush1.bf16.msra.mxu0 %v471
        %489 = vmatprep.subr.bf16.mxu0 0
        %490 = vmatpush1.bf16.msra.mxu0 %v472
        %491 = vmatprep.subr.bf16.mxu0 0
        %492 = vmatpush1.bf16.msra.mxu0 %v473
        %493 = vmatprep.subr.bf16.mxu0 0
        %494 = vmatpush1.bf16.msra.mxu0 %v474
        %495 = vmatprep.subr.bf16.mxu0 0
        %496 = vmatpush1.bf16.msra.mxu0 %v475
        %497 = vmatprep.subr.bf16.mxu0 0
        %498 = vmatpush1.bf16.msra.mxu0 %v476
        %499 = vmatprep.subr.bf16.mxu0 0
        %500 = vmatpush1.bf16.msra.mxu0 %v477
        %501 = vmatprep.subr.bf16.mxu0 0
        %502 = vmatpush1.bf16.msra.mxu0 %v478
        %503 = vmatprep.subr.bf16.mxu0 0
        %504 = vmatpush1.bf16.msra.mxu0 0
        %505 = vmatprep.subr.bf16.mxu0 0
        %506 = vmatpush1.bf16.msra.mxu0 0
        %507 = vmatprep.subr.bf16.mxu0 0
        %508 = vmatpush1.bf16.msra.mxu0 0
        %509 = vmatprep.subr.bf16.mxu0 0
        %510 = vmatpush1.bf16.msra.mxu0 0
        %511 = vmatprep.subr.bf16.mxu0 0
        %512 = vmatpush1.bf16.msra.mxu0 0
        %513 = vmatprep.subr.bf16.mxu0 0
        %514 = vmatpush1.bf16.msra.mxu0 0
        %515 = vmatprep.subr.bf16.mxu0 0
        %516 = vmatpush1.bf16.msra.mxu0 0
        %517 = vmatprep.subr.bf16.mxu0 0
        %518 = vmatpush1.bf16.msra.mxu0 0
        %519 = vmatprep.mubr.bf16.mxu0 0
        %520 = vmatmul.mubr.bf16.gmra.mrb[0].mxu0 %v407
        %v521 = vpop.f32.mrb[0].mxu0
        %v522 = vadd.f32 %v342, %v521
        %v523 = vpop.f32.mrb[0].mxu0
        %v524 = vpop.f32.mrb[0].mxu0
        %v525 = vadd.f32 %v342, %v524
        %v526 = vpop.f32.mrb[0].mxu0
        %527 = vmatprep.mubr.bf16.mxu0 0
        %528 = vmatmul.mubr.bf16.gmra.mrb[0].mxu0 %v408
        %v529 = vpop.f32.mrb[0].mxu0
        %v530 = vadd.f32 %v342, %v529
        %v531 = vpop.f32.mrb[0].mxu0
        %v532 = vpop.f32.mrb[0].mxu0
        %v533 = vadd.f32 %v342, %v532
        %v534 = vpop.f32.mrb[0].mxu0
        %535 = vmatprep.mubr.bf16.mxu0 0
        %536 = vmatmul.mubr.bf16.gmra.mrb[0].mxu0 %v409
        %v537 = vpop.f32.mrb[0].mxu0
        %v538 = vadd.f32 %v342, %v537
        %v539 = vpop.f32.mrb[0].mxu0
        %v540 = vpop.f32.mrb[0].mxu0
        %v541 = vadd.f32 %v342, %v540
        %v542 = vpop.f32.mrb[0].mxu0
        %543 = vmatprep.mubr.bf16.mxu0 0
        %544 = vmatmul.mubr.bf16.gmra.mrb[0].mxu0 %v410
        %v545 = vpop.f32.mrb[0].mxu0
        %v546 = vadd.f32 %v342, %v545
        %v547 = vpop.f32.mrb[0].mxu0
        %v548 = vpop.f32.mrb[0].mxu0
        %v549 = vadd.f32 %v342, %v548
        %v550 = vpop.f32.mrb[0].mxu0
        %551 = vmatprep.mubr.bf16.mxu0 0
        %552 = vmatmul.mubr.bf16.gmra.mrb[0].mxu0 %v411
        %v553 = vpop.f32.mrb[0].mxu0
        %v554 = vadd.f32 %v342, %v553
        %v555 = vpop.f32.mrb[0].mxu0
        %v556 = vpop.f32.mrb[0].mxu0
        %v557 = vadd.f32 %v342, %v556
        %v558 = vpop.f32.mrb[0].mxu0
        %559 = vmatprep.mubr.bf16.mxu0 0
        %560 = vmatmul.mubr.bf16.gmra.mrb[0].mxu0 %v412
        %v561 = vpop.f32.mrb[0].mxu0
        %v562 = vadd.f32 %v342, %v561
        %v563 = vpop.f32.mrb[0].mxu0
        %v564 = vpop.f32.mrb[0].mxu0
        %v565 = vadd.f32 %v342, %v564
        %v566 = vpop.f32.mrb[0].mxu0
        %567 = vmatprep.mubr.bf16.mxu0 0
        %568 = vmatmul.mubr.bf16.gmra.mrb[0].mxu0 %v413
        %v569 = vpop.f32.mrb[0].mxu0
        %v570 = vadd.f32 %v342, %v569
        %v571 = vpop.f32.mrb[0].mxu0
        %v572 = vpop.f32.mrb[0].mxu0
        %v573 = vadd.f32 %v342, %v572
        %v574 = vpop.f32.mrb[0].mxu0
        %575 = vmatprep.mubr.bf16.mxu0 0
        %576 = vmatmul.mubr.bf16.gmra.mrb[0].mxu0 %v414
        %v577 = vpop.f32.mrb[0].mxu0
        %v578 = vadd.f32 %v342, %v577
        %v579 = vpop.f32.mrb[0].mxu0
        %v580 = vpop.f32.mrb[0].mxu0
        %v581 = vadd.f32 %v342, %v580
        %v582 = vpop.f32.mrb[0].mxu0
        %583 = vmatprep.mubr.bf16.mxu0 0
        %584 = vmatmul.mubr.bf16.gmra.mrb[0].mxu0 %v415
        %v585 = vpop.f32.mrb[0].mxu0
        %v586 = vadd.f32 %v342, %v585
        %v587 = vpop.f32.mrb[0].mxu0
        %v588 = vpop.f32.mrb[0].mxu0
        %v589 = vadd.f32 %v342, %v588
        %v590 = vpop.f32.mrb[0].mxu0
        %591 = vmatprep.mubr.bf16.mxu0 0
        %592 = vmatmul.mubr.bf16.gmra.mrb[0].mxu0 %v416
        %v593 = vpop.f32.mrb[0].mxu0
        %v594 = vadd.f32 %v342, %v593
        %v595 = vpop.f32.mrb[0].mxu0
        %v596 = vpop.f32.mrb[0].mxu0
        %v597 = vadd.f32 %v342, %v596
        %v598 = vpop.f32.mrb[0].mxu0
        %599 = vmatprep.mubr.bf16.mxu0 0
        %600 = vmatmul.mubr.bf16.gmra.mrb[0].mxu0 %v417
        %v601 = vpop.f32.mrb[0].mxu0
        %v602 = vadd.f32 %v342, %v601
        %v603 = vpop.f32.mrb[0].mxu0
        %v604 = vpop.f32.mrb[0].mxu0
        %v605 = vadd.f32 %v342, %v604
        %v606 = vpop.f32.mrb[0].mxu0
        %607 = vmatprep.mubr.bf16.mxu0 0
        %608 = vmatmul.mubr.bf16.gmra.mrb[0].mxu0 %v418
        %v609 = vpop.f32.mrb[0].mxu0
        %v610 = vadd.f32 %v342, %v609
        %v611 = vpop.f32.mrb[0].mxu0
        %v612 = vpop.f32.mrb[0].mxu0
        %v613 = vadd.f32 %v342, %v612
        %v614 = vpop.f32.mrb[0].mxu0
        %615 = vmatprep.mubr.bf16.mxu0 0
        %616 = vmatmul.mubr.bf16.gmra.mrb[0].mxu0 %v419
        %v617 = vpop.f32.mrb[0].mxu0
        %v618 = vadd.f32 %v342, %v617
        %v619 = vpop.f32.mrb[0].mxu0
        %v620 = vpop.f32.mrb[0].mxu0
        %v621 = vadd.f32 %v342, %v620
        %v622 = vpop.f32.mrb[0].mxu0
        %623 = vmatprep.mubr.bf16.mxu0 0
        %624 = vmatmul.mubr.bf16.gmra.mrb[0].mxu0 %v420
        %v625 = vpop.f32.mrb[0].mxu0
        %v626 = vadd.f32 %v342, %v625
        %v627 = vpop.f32.mrb[0].mxu0
        %v628 = vpop.f32.mrb[0].mxu0
        %v629 = vadd.f32 %v342, %v628
        %v630 = vpop.f32.mrb[0].mxu0
        %631 = vmatprep.mubr.bf16.mxu0 0
        %632 = vmatmul.mubr.bf16.gmra.mrb[0].mxu0 %v421
        %v633 = vpop.f32.mrb[0].mxu0
        %v634 = vadd.f32 %v342, %v633
        %v635 = vpop.f32.mrb[0].mxu0
        %v636 = vpop.f32.mrb[0].mxu0
        %v637 = vadd.f32 %v342, %v636
        %v638 = vpop.f32.mrb[0].mxu0
        %639 = vmatprep.mubr.bf16.mxu0 0
        %640 = vmatmul.mubr.bf16.gmra.mrb[0].mxu0 %v422
        %v641 = vpop.f32.mrb[0].mxu0
        %v642 = vadd.f32 %v342, %v641
        %v643 = vpop.f32.mrb[0].mxu0
        %v644 = vpop.f32.mrb[0].mxu0
        %v645 = vadd.f32 %v342, %v644
        %v646 = vpop.f32.mrb[0].mxu0
        %647 = vdwg.mxu0
        %v648 = vmax.f32 %v522, 0.0
        %v649 = vmax.f32 %v525, 0.0
        %v650 = vmax.f32 %v530, 0.0
        %v651 = vmax.f32 %v533, 0.0
        %v652 = vmax.f32 %v538, 0.0
        %v653 = vmax.f32 %v541, 0.0
        %v654 = vmax.f32 %v546, 0.0
        %v655 = vmax.f32 %v549, 0.0
        %v656 = vmax.f32 %v554, 0.0
        %v657 = vmax.f32 %v557, 0.0
        %v658 = vmax.f32 %v562, 0.0
        %v659 = vmax.f32 %v565, 0.0
        %v660 = vmax.f32 %v570, 0.0
        %v661 = vmax.f32 %v573, 0.0
        %v662 = vmax.f32 %v578, 0.0
        %v663 = vmax.f32 %v581, 0.0
        %v664 = vmax.f32 %v586, 0.0
        %v665 = vmax.f32 %v589, 0.0
        %v666 = vmax.f32 %v594, 0.0
        %v667 = vmax.f32 %v597, 0.0
        %v668 = vmax.f32 %v602, 0.0
        %v669 = vmax.f32 %v605, 0.0
        %v670 = vmax.f32 %v610, 0.0
        %v671 = vmax.f32 %v613, 0.0
        %v672 = vmax.f32 %v618, 0.0
        %v673 = vmax.f32 %v621, 0.0
        %v674 = vmax.f32 %v626, 0.0
        %v675 = vmax.f32 %v629, 0.0
        %v676 = vmax.f32 %v634, 0.0
        %v677 = vmax.f32 %v637, 0.0
        %v678 = vmax.f32 %v642, 0.0
        %v679 = vmax.f32 %v645, 0.0
        %v680 = vpack.c.bf16 %v649, %v648
        %v681 = vpack.c.bf16 %v651, %v650
        %v682 = vpack.c.bf16 %v653, %v652
        %v683 = vpack.c.bf16 %v655, %v654
        %v684 = vpack.c.bf16 %v657, %v656
        %v685 = vpack.c.bf16 %v659, %v658
        %v686 = vpack.c.bf16 %v661, %v660
        %v687 = vpack.c.bf16 %v663, %v662
        %v688 = vpack.c.bf16 %v665, %v664
        %v689 = vpack.c.bf16 %v667, %v666
        %v690 = vpack.c.bf16 %v669, %v668
        %v691 = vpack.c.bf16 %v671, %v670
        %v692 = vpack.c.bf16 %v673, %v672
        %v693 = vpack.c.bf16 %v675, %v674
        %v694 = vpack.c.bf16 %v677, %v676
        %v695 = vpack.c.bf16 %v679, %v678
        %v696 = vld [vmem:[#allocation7] sm:$0xf]
        %v697 = vld [vmem:[#allocation7 + $0x4] sm:$0xf]
        %v698 = vld [vmem:[#allocation7 + $0x8] sm:$0xf]
        %v699 = vld [vmem:[#allocation7 + $0xc] sm:$0xf]
        %v700 = vld [vmem:[#allocation7 + $0x10] sm:$0xf]
        %v701 = vld [vmem:[#allocation7 + $0x14] sm:$0xf]
        %v702 = vld [vmem:[#allocation7 + $0x18] sm:$0xf]
        %v703 = vld [vmem:[#allocation7 + $0x1c] sm:$0xf]
        %v704 = vld [vmem:[#allocation7 + $0x20] sm:$0xf]
        %v705 = vld [vmem:[#allocation7 + $0x24] sm:$0xf]
        %v706 = vld [vmem:[#allocation7 + $0x28] sm:$0xf]
        %v707 = vld [vmem:[#allocation7 + $0x2c] sm:$0xf]
        %v708 = vld [vmem:[#allocation7 + $0x30] sm:$0xf]
        %v709 = vld [vmem:[#allocation7 + $0x34] sm:$0xf]
        %v710 = vld [vmem:[#allocation7 + $0x38] sm:$0xf]
        %v711 = vld [vmem:[#allocation7 + $0x3c] sm:$0xf]
        %v712 = vlaneseq
        %v713 = vshrl.u32 %v712, 7
        %v714 = vsub.s32 1, %v713
        %v715 = vrot.slane %v290, %v714
        %v732 = vunpack.c.l.b16 %v696
        %v733 = vunpack.c.l.b16 %v697
        %v734 = vunpack.c.l.b16 %v698
        %v735 = vunpack.c.l.b16 %v699
        %v736 = vunpack.c.l.b16 %v700
        %v737 = vunpack.c.l.b16 %v701
        %v738 = vunpack.c.l.b16 %v702
        %v739 = vunpack.c.l.b16 %v703
        %v740 = vunpack.c.l.b16 %v704
        %v741 = vunpack.c.l.b16 %v705
        %v742 = vunpack.c.l.b16 %v706
        %v743 = vunpack.c.l.b16 %v707
        %v744 = vunpack.c.l.b16 %v708
        %v745 = vunpack.c.l.b16 %v709
        %v746 = vunpack.c.l.b16 %v710
        %v747 = vunpack.c.l.b16 %v711
        %v748 = vpack.c.b16 %v733, %v732
        %v749 = vpack.c.b16 %v735, %v734
        %v750 = vpack.c.b16 %v737, %v736
        %v751 = vpack.c.b16 %v739, %v738
        %v752 = vpack.c.b16 %v741, %v740
        %v753 = vpack.c.b16 %v743, %v742
        %v754 = vpack.c.b16 %v745, %v744
        %v755 = vpack.c.b16 %v747, %v746
        %764 = vmatprep.subr.bf16.mxu0 0
        %765 = vmatpush1.bf16.msra.mxu0 %v748
        %766 = vmatprep.subr.bf16.mxu0 0
        %767 = vmatpush1.bf16.msra.mxu0 %v749
        %768 = vmatprep.subr.bf16.mxu0 0
        %769 = vmatpush1.bf16.msra.mxu0 %v750
        %770 = vmatprep.subr.bf16.mxu0 0
        %771 = vmatpush1.bf16.msra.mxu0 %v751
        %772 = vmatprep.subr.bf16.mxu0 0
        %773 = vmatpush1.bf16.msra.mxu0 %v752
        %774 = vmatprep.subr.bf16.mxu0 0
        %775 = vmatpush1.bf16.msra.mxu0 %v753
        %776 = vmatprep.subr.bf16.mxu0 0
        %777 = vmatpush1.bf16.msra.mxu0 %v754
        %778 = vmatprep.subr.bf16.mxu0 0
        %779 = vmatpush1.bf16.msra.mxu0 %v755
        %780 = vmatprep.subr.bf16.mxu0 0
        %781 = vmatpush1.bf16.msra.mxu0 0
        %782 = vmatprep.subr.bf16.mxu0 0
        %783 = vmatpush1.bf16.msra.mxu0 0
        %784 = vmatprep.subr.bf16.mxu0 0
        %785 = vmatpush1.bf16.msra.mxu0 0
        %786 = vmatprep.subr.bf16.mxu0 0
        %787 = vmatpush1.bf16.msra.mxu0 0
        %788 = vmatprep.subr.bf16.mxu0 0
        %789 = vmatpush1.bf16.msra.mxu0 0
        %790 = vmatprep.subr.bf16.mxu0 0
        %791 = vmatpush1.bf16.msra.mxu0 0
        %792 = vmatprep.subr.bf16.mxu0 0
        %793 = vmatpush1.bf16.msra.mxu0 0
        %794 = vmatprep.subr.bf16.mxu0 0
        %795 = vmatpush1.bf16.msra.mxu0 0
        %796 = vmatprep.mubr.bf16.mxu0 0
        %797 = vmatmul.mubr.bf16.gmra.mrb[0].mxu0 %v680
        %v798 = vpop.f32.mrb[0].mxu0
        %v799 = vadd.f32 %v715, %v798
        %v800 = vpop.f32.mrb[0].mxu0
        %v801 = vpop.f32.mrb[0].mxu0
        %v802 = vadd.f32 %v715, %v801
        %v803 = vpop.f32.mrb[0].mxu0
        %804 = vmatprep.mubr.bf16.mxu0 0
        %805 = vmatmul.mubr.bf16.gmra.mrb[0].mxu0 %v681
        %v806 = vpop.f32.mrb[0].mxu0
        %v807 = vadd.f32 %v715, %v806
        %v808 = vpop.f32.mrb[0].mxu0
        %v809 = vpop.f32.mrb[0].mxu0
        %v810 = vadd.f32 %v715, %v809
        %v811 = vpop.f32.mrb[0].mxu0
        %812 = vmatprep.mubr.bf16.mxu0 0
        %813 = vmatmul.mubr.bf16.gmra.mrb[0].mxu0 %v682
        %v814 = vpop.f32.mrb[0].mxu0
        %v815 = vadd.f32 %v715, %v814
        %v816 = vpop.f32.mrb[0].mxu0
        %v817 = vpop.f32.mrb[0].mxu0
        %v818 = vadd.f32 %v715, %v817
        %v819 = vpop.f32.mrb[0].mxu0
        %820 = vmatprep.mubr.bf16.mxu0 0
        %821 = vmatmul.mubr.bf16.gmra.mrb[0].mxu0 %v683
        %v822 = vpop.f32.mrb[0].mxu0
        %v823 = vadd.f32 %v715, %v822
        %v824 = vpop.f32.mrb[0].mxu0
        %v825 = vpop.f32.mrb[0].mxu0
        %v826 = vadd.f32 %v715, %v825
        %v827 = vpop.f32.mrb[0].mxu0
        %828 = vmatprep.mubr.bf16.mxu0 0
        %829 = vmatmul.mubr.bf16.gmra.mrb[0].mxu0 %v684
        %v830 = vpop.f32.mrb[0].mxu0
        %v831 = vadd.f32 %v715, %v830
        %v832 = vpop.f32.mrb[0].mxu0
        %v833 = vpop.f32.mrb[0].mxu0
        %v834 = vadd.f32 %v715, %v833
        %v835 = vpop.f32.mrb[0].mxu0
        %836 = vmatprep.mubr.bf16.mxu0 0
        %837 = vmatmul.mubr.bf16.gmra.mrb[0].mxu0 %v685
        %v838 = vpop.f32.mrb[0].mxu0
        %v839 = vadd.f32 %v715, %v838
        %v840 = vpop.f32.mrb[0].mxu0
        %v841 = vpop.f32.mrb[0].mxu0
        %v842 = vadd.f32 %v715, %v841
        %v843 = vpop.f32.mrb[0].mxu0
        %844 = vmatprep.mubr.bf16.mxu0 0
        %845 = vmatmul.mubr.bf16.gmra.mrb[0].mxu0 %v686
        %v846 = vpop.f32.mrb[0].mxu0
        %v847 = vadd.f32 %v715, %v846
        %v848 = vpop.f32.mrb[0].mxu0
        %v849 = vpop.f32.mrb[0].mxu0
        %v850 = vadd.f32 %v715, %v849
        %v851 = vpop.f32.mrb[0].mxu0
        %852 = vmatprep.mubr.bf16.mxu0 0
        %853 = vmatmul.mubr.bf16.gmra.mrb[0].mxu0 %v687
        %v854 = vpop.f32.mrb[0].mxu0
        %v855 = vadd.f32 %v715, %v854
        %v856 = vpop.f32.mrb[0].mxu0
        %v857 = vpop.f32.mrb[0].mxu0
        %v858 = vadd.f32 %v715, %v857
        %v859 = vpop.f32.mrb[0].mxu0
        %860 = vmatprep.mubr.bf16.mxu0 0
        %861 = vmatmul.mubr.bf16.gmra.mrb[0].mxu0 %v688
        %v862 = vpop.f32.mrb[0].mxu0
        %v863 = vadd.f32 %v715, %v862
        %v864 = vpop.f32.mrb[0].mxu0
        %v865 = vpop.f32.mrb[0].mxu0
        %v866 = vadd.f32 %v715, %v865
        %v867 = vpop.f32.mrb[0].mxu0
        %868 = vmatprep.mubr.bf16.mxu0 0
        %869 = vmatmul.mubr.bf16.gmra.mrb[0].mxu0 %v689
        %v870 = vpop.f32.mrb[0].mxu0
        %v871 = vadd.f32 %v715, %v870
        %v872 = vpop.f32.mrb[0].mxu0
        %v873 = vpop.f32.mrb[0].mxu0
        %v874 = vadd.f32 %v715, %v873
        %v875 = vpop.f32.mrb[0].mxu0
        %876 = vmatprep.mubr.bf16.mxu0 0
        %877 = vmatmul.mubr.bf16.gmra.mrb[0].mxu0 %v690
        %v878 = vpop.f32.mrb[0].mxu0
        %v879 = vadd.f32 %v715, %v878
        %v880 = vpop.f32.mrb[0].mxu0
        %v881 = vpop.f32.mrb[0].mxu0
        %v882 = vadd.f32 %v715, %v881
        %v883 = vpop.f32.mrb[0].mxu0
        %884 = vmatprep.mubr.bf16.mxu0 0
        %885 = vmatmul.mubr.bf16.gmra.mrb[0].mxu0 %v691
        %v886 = vpop.f32.mrb[0].mxu0
        %v887 = vadd.f32 %v715, %v886
        %v888 = vpop.f32.mrb[0].mxu0
        %v889 = vpop.f32.mrb[0].mxu0
        %v890 = vadd.f32 %v715, %v889
        %v891 = vpop.f32.mrb[0].mxu0
        %892 = vmatprep.mubr.bf16.mxu0 0
        %893 = vmatmul.mubr.bf16.gmra.mrb[0].mxu0 %v692
        %v894 = vpop.f32.mrb[0].mxu0
        %v895 = vadd.f32 %v715, %v894
        %v896 = vpop.f32.mrb[0].mxu0
        %v897 = vpop.f32.mrb[0].mxu0
        %v898 = vadd.f32 %v715, %v897
        %v899 = vpop.f32.mrb[0].mxu0
        %900 = vmatprep.mubr.bf16.mxu0 0
        %901 = vmatmul.mubr.bf16.gmra.mrb[0].mxu0 %v693
        %v902 = vpop.f32.mrb[0].mxu0
        %v903 = vadd.f32 %v715, %v902
        %v904 = vpop.f32.mrb[0].mxu0
        %v905 = vpop.f32.mrb[0].mxu0
        %v906 = vadd.f32 %v715, %v905
        %v907 = vpop.f32.mrb[0].mxu0
        %908 = vmatprep.mubr.bf16.mxu0 0
        %909 = vmatmul.mubr.bf16.gmra.mrb[0].mxu0 %v694
        %v910 = vpop.f32.mrb[0].mxu0
        %v911 = vadd.f32 %v715, %v910
        %v912 = vpop.f32.mrb[0].mxu0
        %v913 = vpop.f32.mrb[0].mxu0
        %v914 = vadd.f32 %v715, %v913
        %v915 = vpop.f32.mrb[0].mxu0
        %916 = vmatprep.mubr.bf16.mxu0 0
        %917 = vmatmul.mubr.bf16.gmra.mrb[0].mxu0 %v695
        %v918 = vpop.f32.mrb[0].mxu0
        %v919 = vadd.f32 %v715, %v918
        %v920 = vpop.f32.mrb[0].mxu0
        %v921 = vpop.f32.mrb[0].mxu0
        %v922 = vadd.f32 %v715, %v921
        %v923 = vpop.f32.mrb[0].mxu0
        %924 = vdwg.mxu0
        %v925 = vmax.f32 %v799, 0.0
        %v926 = vmax.f32 %v802, 0.0
        %v927 = vmax.f32 %v807, 0.0
        %v928 = vmax.f32 %v810, 0.0
        %v929 = vmax.f32 %v815, 0.0
        %v930 = vmax.f32 %v818, 0.0
        %v931 = vmax.f32 %v823, 0.0
        %v932 = vmax.f32 %v826, 0.0
        %v933 = vmax.f32 %v831, 0.0
        %v934 = vmax.f32 %v834, 0.0
        %v935 = vmax.f32 %v839, 0.0
        %v936 = vmax.f32 %v842, 0.0
        %v937 = vmax.f32 %v847, 0.0
        %v938 = vmax.f32 %v850, 0.0
        %v939 = vmax.f32 %v855, 0.0
        %v940 = vmax.f32 %v858, 0.0
        %v941 = vmax.f32 %v863, 0.0
        %v942 = vmax.f32 %v866, 0.0
        %v943 = vmax.f32 %v871, 0.0
        %v944 = vmax.f32 %v874, 0.0
        %v945 = vmax.f32 %v879, 0.0
        %v946 = vmax.f32 %v882, 0.0
        %v947 = vmax.f32 %v887, 0.0
        %v948 = vmax.f32 %v890, 0.0
        %v949 = vmax.f32 %v895, 0.0
        %v950 = vmax.f32 %v898, 0.0
        %v951 = vmax.f32 %v903, 0.0
        %v952 = vmax.f32 %v906, 0.0
        %v953 = vmax.f32 %v911, 0.0
        %v954 = vmax.f32 %v914, 0.0
        %v955 = vmax.f32 %v919, 0.0
        %v956 = vmax.f32 %v922, 0.0
        %v957 = vpack.c.bf16 %v926, %v925
        %v958 = vpack.c.bf16 %v928, %v927
        %v959 = vpack.c.bf16 %v930, %v929
        %v960 = vpack.c.bf16 %v932, %v931
        %v961 = vpack.c.bf16 %v934, %v933
        %v962 = vpack.c.bf16 %v936, %v935
        %v963 = vpack.c.bf16 %v938, %v937
        %v964 = vpack.c.bf16 %v940, %v939
        %v965 = vpack.c.bf16 %v942, %v941
        %v966 = vpack.c.bf16 %v944, %v943
        %v967 = vpack.c.bf16 %v946, %v945
        %v968 = vpack.c.bf16 %v948, %v947
        %v969 = vpack.c.bf16 %v950, %v949
        %v970 = vpack.c.bf16 %v952, %v951
        %v971 = vpack.c.bf16 %v954, %v953
        %v972 = vpack.c.bf16 %v956, %v955
        %v973 = vld [vmem:[#allocation8] sm:$0xf]
        %v974 = vld [vmem:[#allocation8 + $0x4] sm:$0xf]
        %v975 = vld [vmem:[#allocation8 + $0x8] sm:$0xf]
        %v976 = vld [vmem:[#allocation8 + $0xc] sm:$0xf]
        %v977 = vld [vmem:[#allocation8 + $0x10] sm:$0xf]
        %v978 = vld [vmem:[#allocation8 + $0x14] sm:$0xf]
        %v979 = vld [vmem:[#allocation8 + $0x18] sm:$0xf]
        %v980 = vld [vmem:[#allocation8 + $0x1c] sm:$0xf]
        %v981 = vld [vmem:[#allocation8 + $0x20] sm:$0xf]
        %v982 = vld [vmem:[#allocation8 + $0x24] sm:$0xf]
        %v983 = vld [vmem:[#allocation8 + $0x28] sm:$0xf]
        %v984 = vld [vmem:[#allocation8 + $0x2c] sm:$0xf]
        %v985 = vld [vmem:[#allocation8 + $0x30] sm:$0xf]
        %v986 = vld [vmem:[#allocation8 + $0x34] sm:$0xf]
        %v987 = vld [vmem:[#allocation8 + $0x38] sm:$0xf]
        %v988 = vld [vmem:[#allocation8 + $0x3c] sm:$0xf]
        %v989 = vlaneseq
        %v990 = vshrl.u32 %v989, 7
        %v991 = vsub.s32 2, %v990
        %v992 = vrot.slane %v290, %v991
        %v1009 = vunpack.c.l.b16 %v973
        %v1010 = vunpack.c.l.b16 %v974
        %v1011 = vunpack.c.l.b16 %v975
        %v1012 = vunpack.c.l.b16 %v976
        %v1013 = vunpack.c.l.b16 %v977
        %v1014 = vunpack.c.l.b16 %v978
        %v1015 = vunpack.c.l.b16 %v979
        %v1016 = vunpack.c.l.b16 %v980
        %v1017 = vunpack.c.l.b16 %v981
        %v1018 = vunpack.c.l.b16 %v982
        %v1019 = vunpack.c.l.b16 %v983
        %v1020 = vunpack.c.l.b16 %v984
        %v1021 = vunpack.c.l.b16 %v985
        %v1022 = vunpack.c.l.b16 %v986
        %v1023 = vunpack.c.l.b16 %v987
        %v1024 = vunpack.c.l.b16 %v988
        %v1025 = vpack.c.b16 %v1010, %v1009
        %v1026 = vpack.c.b16 %v1012, %v1011
        %v1027 = vpack.c.b16 %v1014, %v1013
        %v1028 = vpack.c.b16 %v1016, %v1015
        %v1029 = vpack.c.b16 %v1018, %v1017
        %v1030 = vpack.c.b16 %v1020, %v1019
        %v1031 = vpack.c.b16 %v1022, %v1021
        %v1032 = vpack.c.b16 %v1024, %v1023
        %1041 = vmatprep.subr.bf16.mxu0 0
        %1042 = vmatpush1.bf16.msra.mxu0 %v1025
        %1043 = vmatprep.subr.bf16.mxu0 0
        %1044 = vmatpush1.bf16.msra.mxu0 %v1026
        %1045 = vmatprep.subr.bf16.mxu0 0
        %1046 = vmatpush1.bf16.msra.mxu0 %v1027
        %1047 = vmatprep.subr.bf16.mxu0 0
        %1048 = vmatpush1.bf16.msra.mxu0 %v1028
        %1049 = vmatprep.subr.bf16.mxu0 0
        %1050 = vmatpush1.bf16.msra.mxu0 %v1029
        %1051 = vmatprep.subr.bf16.mxu0 0
        %1052 = vmatpush1.bf16.msra.mxu0 %v1030
        %1053 = vmatprep.subr.bf16.mxu0 0
        %1054 = vmatpush1.bf16.msra.mxu0 %v1031
        %1055 = vmatprep.subr.bf16.mxu0 0
        %1056 = vmatpush1.bf16.msra.mxu0 %v1032
        %1057 = vmatprep.subr.bf16.mxu0 0
        %1058 = vmatpush1.bf16.msra.mxu0 0
        %1059 = vmatprep.subr.bf16.mxu0 0
        %1060 = vmatpush1.bf16.msra.mxu0 0
        %1061 = vmatprep.subr.bf16.mxu0 0
        %1062 = vmatpush1.bf16.msra.mxu0 0
        %1063 = vmatprep.subr.bf16.mxu0 0
        %1064 = vmatpush1.bf16.msra.mxu0 0
        %1065 = vmatprep.subr.bf16.mxu0 0
        %1066 = vmatpush1.bf16.msra.mxu0 0
        %1067 = vmatprep.subr.bf16.mxu0 0
        %1068 = vmatpush1.bf16.msra.mxu0 0
        %1069 = vmatprep.subr.bf16.mxu0 0
        %1070 = vmatpush1.bf16.msra.mxu0 0
        %1071 = vmatprep.subr.bf16.mxu0 0
        %1072 = vmatpush1.bf16.msra.mxu0 0
        %1073 = vmatprep.mubr.bf16.mxu0 0
        %1074 = vmatmul.mubr.bf16.gmra.mrb[0].mxu0 %v957
        %v1075 = vpop.f32.mrb[0].mxu0
        %v1076 = vadd.f32 %v992, %v1075
        %v1077 = vpop.f32.mrb[0].mxu0
        %v1078 = vpop.f32.mrb[0].mxu0
        %v1079 = vadd.f32 %v992, %v1078
        %v1080 = vpop.f32.mrb[0].mxu0
        %1081 = vmatprep.mubr.bf16.mxu0 0
        %1082 = vmatmul.mubr.bf16.gmra.mrb[0].mxu0 %v958
        %v1083 = vpop.f32.mrb[0].mxu0
        %v1084 = vadd.f32 %v992, %v1083
        %v1085 = vpop.f32.mrb[0].mxu0
        %v1086 = vpop.f32.mrb[0].mxu0
        %v1087 = vadd.f32 %v992, %v1086
        %v1088 = vpop.f32.mrb[0].mxu0
        %1089 = vmatprep.mubr.bf16.mxu0 0
        %1090 = vmatmul.mubr.bf16.gmra.mrb[0].mxu0 %v959
        %v1091 = vpop.f32.mrb[0].mxu0
        %v1092 = vadd.f32 %v992, %v1091
        %v1093 = vpop.f32.mrb[0].mxu0
        %v1094 = vpop.f32.mrb[0].mxu0
        %v1095 = vadd.f32 %v992, %v1094
        %v1096 = vpop.f32.mrb[0].mxu0
        %1097 = vmatprep.mubr.bf16.mxu0 0
        %1098 = vmatmul.mubr.bf16.gmra.mrb[0].mxu0 %v960
        %v1099 = vpop.f32.mrb[0].mxu0
        %v1100 = vadd.f32 %v992, %v1099
        %v1101 = vpop.f32.mrb[0].mxu0
        %v1102 = vpop.f32.mrb[0].mxu0
        %v1103 = vadd.f32 %v992, %v1102
        %v1104 = vpop.f32.mrb[0].mxu0
        %1105 = vmatprep.mubr.bf16.mxu0 0
        %1106 = vmatmul.mubr.bf16.gmra.mrb[0].mxu0 %v961
        %v1107 = vpop.f32.mrb[0].mxu0
        %v1108 = vadd.f32 %v992, %v1107
        %v1109 = vpop.f32.mrb[0].mxu0
        %v1110 = vpop.f32.mrb[0].mxu0
        %v1111 = vadd.f32 %v992, %v1110
        %v1112 = vpop.f32.mrb[0].mxu0
        %1113 = vmatprep.mubr.bf16.mxu0 0
        %1114 = vmatmul.mubr.bf16.gmra.mrb[0].mxu0 %v962
        %v1115 = vpop.f32.mrb[0].mxu0
        %v1116 = vadd.f32 %v992, %v1115
        %v1117 = vpop.f32.mrb[0].mxu0
        %v1118 = vpop.f32.mrb[0].mxu0
        %v1119 = vadd.f32 %v992, %v1118
        %v1120 = vpop.f32.mrb[0].mxu0
        %1121 = vmatprep.mubr.bf16.mxu0 0
        %1122 = vmatmul.mubr.bf16.gmra.mrb[0].mxu0 %v963
        %v1123 = vpop.f32.mrb[0].mxu0
        %v1124 = vadd.f32 %v992, %v1123
        %v1125 = vpop.f32.mrb[0].mxu0
        %v1126 = vpop.f32.mrb[0].mxu0
        %v1127 = vadd.f32 %v992, %v1126
        %v1128 = vpop.f32.mrb[0].mxu0
        %1129 = vmatprep.mubr.bf16.mxu0 0
        %1130 = vmatmul.mubr.bf16.gmra.mrb[0].mxu0 %v964
        %v1131 = vpop.f32.mrb[0].mxu0
        %v1132 = vadd.f32 %v992, %v1131
        %v1133 = vpop.f32.mrb[0].mxu0
        %v1134 = vpop.f32.mrb[0].mxu0
        %v1135 = vadd.f32 %v992, %v1134
        %v1136 = vpop.f32.mrb[0].mxu0
        %1137 = vmatprep.mubr.bf16.mxu0 0
        %1138 = vmatmul.mubr.bf16.gmra.mrb[0].mxu0 %v965
        %v1139 = vpop.f32.mrb[0].mxu0
        %v1140 = vadd.f32 %v992, %v1139
        %v1141 = vpop.f32.mrb[0].mxu0
        %v1142 = vpop.f32.mrb[0].mxu0
        %v1143 = vadd.f32 %v992, %v1142
        %v1144 = vpop.f32.mrb[0].mxu0
        %1145 = vmatprep.mubr.bf16.mxu0 0
        %1146 = vmatmul.mubr.bf16.gmra.mrb[0].mxu0 %v966
        %v1147 = vpop.f32.mrb[0].mxu0
        %v1148 = vadd.f32 %v992, %v1147
        %v1149 = vpop.f32.mrb[0].mxu0
        %v1150 = vpop.f32.mrb[0].mxu0
        %v1151 = vadd.f32 %v992, %v1150
        %v1152 = vpop.f32.mrb[0].mxu0
        %1153 = vmatprep.mubr.bf16.mxu0 0
        %1154 = vmatmul.mubr.bf16.gmra.mrb[0].mxu0 %v967
        %v1155 = vpop.f32.mrb[0].mxu0
        %v1156 = vadd.f32 %v992, %v1155
        %v1157 = vpop.f32.mrb[0].mxu0
        %v1158 = vpop.f32.mrb[0].mxu0
        %v1159 = vadd.f32 %v992, %v1158
        %v1160 = vpop.f32.mrb[0].mxu0
        %1161 = vmatprep.mubr.bf16.mxu0 0
        %1162 = vmatmul.mubr.bf16.gmra.mrb[0].mxu0 %v968
        %v1163 = vpop.f32.mrb[0].mxu0
        %v1164 = vadd.f32 %v992, %v1163
        %v1165 = vpop.f32.mrb[0].mxu0
        %v1166 = vpop.f32.mrb[0].mxu0
        %v1167 = vadd.f32 %v992, %v1166
        %v1168 = vpop.f32.mrb[0].mxu0
        %1169 = vmatprep.mubr.bf16.mxu0 0
        %1170 = vmatmul.mubr.bf16.gmra.mrb[0].mxu0 %v969
        %v1171 = vpop.f32.mrb[0].mxu0
        %v1172 = vadd.f32 %v992, %v1171
        %v1173 = vpop.f32.mrb[0].mxu0
        %v1174 = vpop.f32.mrb[0].mxu0
        %v1175 = vadd.f32 %v992, %v1174
        %v1176 = vpop.f32.mrb[0].mxu0
        %1177 = vmatprep.mubr.bf16.mxu0 0
        %1178 = vmatmul.mubr.bf16.gmra.mrb[0].mxu0 %v970
        %v1179 = vpop.f32.mrb[0].mxu0
        %v1180 = vadd.f32 %v992, %v1179
        %v1181 = vpop.f32.mrb[0].mxu0
        %v1182 = vpop.f32.mrb[0].mxu0
        %v1183 = vadd.f32 %v992, %v1182
        %v1184 = vpop.f32.mrb[0].mxu0
        %1185 = vmatprep.mubr.bf16.mxu0 0
        %1186 = vmatmul.mubr.bf16.gmra.mrb[0].mxu0 %v971
        %v1187 = vpop.f32.mrb[0].mxu0
        %v1188 = vadd.f32 %v992, %v1187
        %v1189 = vpop.f32.mrb[0].mxu0
        %v1190 = vpop.f32.mrb[0].mxu0
        %v1191 = vadd.f32 %v992, %v1190
        %v1192 = vpop.f32.mrb[0].mxu0
        %1193 = vmatprep.mubr.bf16.mxu0 0
        %1194 = vmatmul.mubr.bf16.gmra.mrb[0].mxu0 %v972
        %v1195 = vpop.f32.mrb[0].mxu0
        %v1196 = vadd.f32 %v992, %v1195
        %v1197 = vpop.f32.mrb[0].mxu0
        %v1198 = vpop.f32.mrb[0].mxu0
        %v1199 = vadd.f32 %v992, %v1198
        %v1200 = vpop.f32.mrb[0].mxu0
        %1201 = vdwg.mxu0
        %1202 = vst [vmem:[%s286] sm:$0xff] %v1076
        %1203 = vst [vmem:[%s286 + $0x8] sm:$0xff] %v1079
        %1204 = vst [vmem:[%s286 + $0x10] sm:$0xff] %v1084
        %1205 = vst [vmem:[%s286 + $0x18] sm:$0xff] %v1087
        %1206 = vst [vmem:[%s286 + $0x20] sm:$0xff] %v1092
        %1207 = vst [vmem:[%s286 + $0x28] sm:$0xff] %v1095
        %1208 = vst [vmem:[%s286 + $0x30] sm:$0xff] %v1100
        %1209 = vst [vmem:[%s286 + $0x38] sm:$0xff] %v1103
        %1210 = vst [vmem:[%s286 + $0x40] sm:$0xff] %v1108
        %1211 = vst [vmem:[%s286 + $0x48] sm:$0xff] %v1111
        %1212 = vst [vmem:[%s286 + $0x50] sm:$0xff] %v1116
        %1213 = vst [vmem:[%s286 + $0x58] sm:$0xff] %v1119
        %1214 = vst [vmem:[%s286 + $0x60] sm:$0xff] %v1124
        %1215 = vst [vmem:[%s286 + $0x68] sm:$0xff] %v1127
        %1216 = vst [vmem:[%s286 + $0x70] sm:$0xff] %v1132
        %1217 = vst [vmem:[%s286 + $0x78] sm:$0xff] %v1135
        %1218 = vst [vmem:[%s286 + $0x80] sm:$0xff] %v1140
        %1219 = vst [vmem:[%s286 + $0x88] sm:$0xff] %v1143
        %1220 = vst [vmem:[%s286 + $0x90] sm:$0xff] %v1148
        %1221 = vst [vmem:[%s286 + $0x98] sm:$0xff] %v1151
        %1222 = vst [vmem:[%s286 + $0xa0] sm:$0xff] %v1156
        %1223 = vst [vmem:[%s286 + $0xa8] sm:$0xff] %v1159
        %1224 = vst [vmem:[%s286 + $0xb0] sm:$0xff] %v1164
        %1225 = vst [vmem:[%s286 + $0xb8] sm:$0xff] %v1167
        %1226 = vst [vmem:[%s286 + $0xc0] sm:$0xff] %v1172
        %1227 = vst [vmem:[%s286 + $0xc8] sm:$0xff] %v1175
        %1228 = vst [vmem:[%s286 + $0xd0] sm:$0xff] %v1180
        %1229 = vst [vmem:[%s286 + $0xd8] sm:$0xff] %v1183
        %1230 = vst [vmem:[%s286 + $0xe0] sm:$0xff] %v1188
        %1231 = vst [vmem:[%s286 + $0xe8] sm:$0xff] %v1191
        %1232 = vst [vmem:[%s286 + $0xf0] sm:$0xff] %v1196
        %1233 = vst [vmem:[%s286 + $0xf8] sm:$0xff] %v1199
        %s1234 = sand.u32 %s142, 1
        %s1235 = scalar_lea.sflag [#allocation4], %s1234
        %s1236 = sand.u32 %s142, 1
        %s1237 = smul.addr %s1236, 256
        %s1238 = scalar_lea.vmem [#allocation10], %s1237
        // Predicated region
        $region57: #{tpu_custom_call.1} parent=39 // pred_check
          %p1239 = pneg %p152
        $region58: #{tpu_custom_call.1} parent=39 // pred_check_branch
          %1241 = sbr.rel (%p1239) target = $region60
        $region59: #{tpu_custom_call.1} parent=39 // pred_region
          %s1242 = smul.u32 32, %s24
          %s1244 = ssub.s32 4096, 4096
          %1245 = vsyncadd %s1235, %s1244
          %s1246 = smul.addr %s1242, 128
          %s1247 = scalar_lea.hbm %s5, %s1246
          %s1248 = sshll.u32 %s1238, 4
          %s1249 = int_to_ptr.vmem [resolvable:$true] %s1248
          %1254 = dma.vmem_to_hbm [thread:$0]  %s1249, 4096, %s1247, %s1235, 128, 128, 8
        $region60: #{tpu_custom_call.1} parent=39 // pred_fallthru
          _
      $region40: #{tpu_custom_call.1} parent=5 // pred_fallthru
        _
      %p1255 = scmp.le.s32.totalorder 2, %s19
      // Predicated region
      $region61: #{tpu_custom_call.1} parent=5 // pred_check
        %p1256 = pneg %p1255
      $region62: #{tpu_custom_call.1} parent=5 // pred_check_branch
        %1258 = sbr.rel (%p1256) target = $region64
      $region63: #{tpu_custom_call.1} parent=5 // pred_region
        %s1259 = ssub.s32 %s19, 2
        // Predicated region
        $region65: #{tpu_custom_call.1} parent=63 // pred_check
          %p1260 = pneg %p158
        $region66: #{tpu_custom_call.1} parent=63 // pred_check_branch
          %1262 = sbr.rel (%p1260) target = $region68
        $region67: #{tpu_custom_call.1} parent=63 // pred_region
          %s1263 = sand.u32 %s143, 1
          %s1264 = scalar_lea.sflag [#allocation4], %s1263
          %s1265 = sand.u32 %s143, 1
          %s1266 = smul.addr %s1265, 256
          %s1267 = scalar_lea.vmem [#allocation10], %s1266
          %1268 = dma.done %s1264, 4096
        $region68: #{tpu_custom_call.1} parent=63 // pred_fallthru
          _
      $region64: #{tpu_custom_call.1} parent=5 // pred_fallthru
        _
    $region6: #{tpu_custom_call.1} parent=1 // loop_footer
      %s23 = sadd.s32 1, %s19
    $region7: #{tpu_custom_call.1} parent=1 // loop_footer_branch
      %18 = sbr.rel target = $region3
    $region8: #{tpu_custom_call.1} parent=1 // loop_exit
      _
    %1269 = vsyncpa [#allocation3], 1
    %s1270 = scalar_lea.sflag [#allocation3], 1
    %1271 = vsyncpa %s1270, 1
    %1272 = vsyncpa [#allocation6], 1
    %1273 = vsyncpa [#allocation9], 1
    %1274 = vsyncpa [#allocation4], 1
    %s1275 = scalar_lea.sflag [#allocation4], 1
    %1276 = vsyncpa %s1275, 1

</llo_original>
